<compile_context>
chip_gen: v7x
topology: tpu7x:2x2x1
jax: 0.10.0
libtpu: 0.0.40
codegen_flags: <defaults>
</compile_context>

<pallas_src>
import functools

import jax
import jax.numpy as jnp
from jax.experimental import pallas as pl
from jax.experimental.pallas import tpu as pltpu


# ----------------------------------------------------------------------------
# Kernels (feature-major layout: blocks are (features, batch_tile))
# ----------------------------------------------------------------------------
def _linres_kernel(xt_ref, w_ref, b_ref, o_ref):
    """scale == 0 path:  out^T = W @ x^T + b + x^T."""
    xt = xt_ref[...]                                      # (in_ft, TB)
    y = jnp.dot(w_ref[...], xt, preferred_element_type=jnp.float32)
    o_ref[...] = (y + b_ref[...] + xt).astype(o_ref.dtype)


def _linres_quant_kernel(xt_ref, w_ref, b_ref, o_ref, *, scale: float):
    """scale != 0, ARMINT=False path (bias already holds qb + scale//2):
    out^T = floor((qW @ x^T + (qb + scale//2) + x^T*scale) / scale)
            .int32().float()"""
    xt = xt_ref[...]                                      # (in_ft, TB)
    y = jnp.dot(w_ref[...], xt, preferred_element_type=jnp.float32)
    acc = y + b_ref[...] + xt * jnp.float32(scale)
    out = jnp.floor(acc / jnp.float32(scale))             # true divide (exact)
    o_ref[...] = out.astype(jnp.int32).astype(o_ref.dtype)


# ----------------------------------------------------------------------------
# Feature-major entry point (x already laid out (in_ft, B)) — the fast path.
# ----------------------------------------------------------------------------
def custom_linear_res_block_fm(x_t, weight, bias, qw=None, qb=None,
                               scale: int = 0, tile_b: int | None = None):
    """x_t: (in_ft, B) float32, weight: (out_ft, in_ft), bias: (out_ft,)."""
    in_ft, batch = x_t.shape
    out_ft = weight.shape[0]
    assert out_ft == in_ft, "residual requires out_ft == in_ft"

    if scale == 0:
        w_use = weight.astype(jnp.float32)
        b_use = bias.astype(jnp.float32)
        kernel = _linres_kernel
    else:
        w_use = qw.astype(jnp.float32)
        # Fold the constant rounding offset into the (tiny, resident) bias.
        b_use = qb.astype(jnp.float32) + jnp.float32(scale // 2)
        kernel = functools.partial(_linres_quant_kernel, scale=float(scale))

    b2 = b_use.reshape(out_ft, 1)                         # lane-broadcastable

    # ---- tile the (lane) batch axis -----------------------------------------
    if tile_b is None:
        # ~8 MiB of double-buffered x/out pipeline buffers:
        #   2 bufs * (in_ft + out_ft) * tile_b * 4B  <=  budget
        budget = 8 * 1024 * 1024
        t = budget // (8 * (in_ft + out_ft))
        tile_b = int(max(128, min(16384, (t // 128) * 128)))
    # Don't make the tile (much) larger than the problem.
    tile_b = min(tile_b, max(128, -(-batch // 128) * 128))

    n_tiles = pl.cdiv(batch, tile_b)
    b_pad = n_tiles * tile_b
    if b_pad != batch:
        x_t = jnp.pad(x_t, ((0, 0), (0, b_pad - batch)))  # tail-tile padding

    out_t = pl.pallas_call(
        kernel,
        out_shape=jax.ShapeDtypeStruct((out_ft, b_pad), jnp.float32),
        grid=(n_tiles,),
        in_specs=[
            pl.BlockSpec((in_ft, tile_b), lambda i: (0, i)),   # x^T   (tiled)
            pl.BlockSpec((out_ft, in_ft), lambda i: (0, 0)),   # W     (resident)
            pl.BlockSpec((out_ft, 1), lambda i: (0, 0)),       # bias  (resident)
        ],
        out_specs=pl.BlockSpec((out_ft, tile_b), lambda i: (0, i)),
        compiler_params=pltpu.CompilerParams(
            dimension_semantics=("parallel",)),                # megacore on v7x
    )(x_t, w_use, b2)

    return out_t[:, :batch] if b_pad != batch else out_t


# ----------------------------------------------------------------------------
# Row-major public wrapper (matches the torch module's (B, in_ft) layout).
# The transposes are pure layout plumbing; callers that can keep activations
# feature-major should call custom_linear_res_block_fm directly.
# ----------------------------------------------------------------------------
def custom_linear_res_block(x, weight, bias, qw=None, qb=None,
                            scale: int = 0, tile_b: int | None = None):
    """x: (B, in_ft) float32, weight: (out_ft, in_ft), bias: (out_ft,)."""
    out_t = custom_linear_res_block_fm(jnp.transpose(x), weight, bias,
                                       qw=qw, qb=qb, scale=scale, tile_b=tile_b)
    return jnp.transpose(out_t)


# ----------------------------------------------------------------------------
# Demo / self-test
# ----------------------------------------------------------------------------
if __name__ == "__main__":
    key = jax.random.PRNGKey(0)
    k_x, k_w, k_b = jax.random.split(key, 3)

    B, F = 200, 32  # batch=200 (exercises tail padding), in_ft = out_ft = 32

    x = jax.random.normal(k_x, (B, F), dtype=jnp.float32)
    # Module __init__ zero-inits; use deterministic random values instead so
    # the matmul actually exercises the MXU path.
    weight = jax.random.normal(k_w, (F, F), dtype=jnp.float32) * 0.1
    bias = jax.random.normal(k_b, (F,), dtype=jnp.float32) * 0.1

    # quantized params (scale != 0 path); emulate int32 weights stored as float
    qw = jnp.round(weight * 16.0)
    qb = jnp.round(bias * 16.0)

    # --- scale == 0 path ------------------------------------------------------
    out0 = custom_linear_res_block(x, weight, bias, scale=0)
    out0 = jax.block_until_ready(out0)
    ref0 = x @ weight.T + bias + x
    assert out0.shape == ref0.shape
    assert jnp.allclose(out0, ref0, atol=1e-5, rtol=1e-5), "scale=0 mismatch"

    # --- scale != 0 path (ARMINT = False) -------------------------------------
    scale = 256
    out1 = custom_linear_res_block(x, weight, bias, qw=qw, qb=qb, scale=scale)
    out1 = jax.block_until_ready(out1)
    ref1 = jnp.floor(
        (x @ qw.T + qb + x * scale + scale // 2) / scale
    ).astype(jnp.int32).astype(jnp.float32)
    assert out1.shape == ref1.shape
    assert jnp.allclose(out1, ref1, atol=1e-5, rtol=1e-5), "scale!=0 mismatch"

    print("KERNEL_OK")
</pallas_src>

<mosaic_0001>
module attributes {stable_mosaic.version = 11 : i64} {
  func.func @_linres_kernel(%arg0: i32, %arg1: memref<32x256xf32, #tpu.memory_space<vmem>>, %arg2: memref<32x32xf32, #tpu.memory_space<vmem>>, %arg3: memref<32x1xf32, #tpu.memory_space<vmem>>, %arg4: memref<32x256xf32, #tpu.memory_space<vmem>>) attributes {dimension_semantics = [#tpu.dimension_semantics<parallel>], iteration_bounds = array<i64: 1>, scalar_prefetch = 0 : i64, scratch_operands = 0 : i64, tpu.core_type = #tpu.core_type<tc>, window_params = [{transform_indices = @transform_0, window_bounds = array<i64: 32, 256>}, {pipeline_mode = #tpu.pipeline_mode<synchronous>, transform_indices = @transform_1, window_bounds = array<i64: 32, 32>}, {pipeline_mode = #tpu.pipeline_mode<synchronous>, transform_indices = @transform_2, window_bounds = array<i64: 32, 1>}, {transform_indices = @transform_3, window_bounds = array<i64: 32, 256>}]} {
    %c0 = arith.constant 0 : index
    %c0_0 = arith.constant 0 : index
    %0 = vector.load %arg1[%c0, %c0_0] : memref<32x256xf32, #tpu.memory_space<vmem>>, vector<32x256xf32>
    %c0_1 = arith.constant 0 : index
    %c0_2 = arith.constant 0 : index
    %1 = vector.load %arg2[%c0_1, %c0_2] : memref<32x32xf32, #tpu.memory_space<vmem>>, vector<32x32xf32>
    %cst = arith.constant dense<0.000000e+00> : vector<32x256xf32>
    %2 = tpu.matmul %1, %0, %cst {dimension_numbers = #tpu.dot_dimension_numbers<[1], [0], [0], [1], [0, 0, 1, 1], [], []>} : vector<32x32xf32>, vector<32x256xf32>, vector<32x256xf32> -> vector<32x256xf32>
    %c0_3 = arith.constant 0 : index
    %c0_4 = arith.constant 0 : index
    %3 = vector.load %arg3[%c0_3, %c0_4] : memref<32x1xf32, #tpu.memory_space<vmem>>, vector<32x1xf32>
    %4 = vector.broadcast %3 : vector<32x1xf32> to vector<32x256xf32>
    %5 = arith.addf %2, %4 : vector<32x256xf32>
    %6 = arith.addf %5, %0 : vector<32x256xf32>
    %c0_5 = arith.constant 0 : index
    %c0_6 = arith.constant 0 : index
    %7 = vector.load %arg4[%c0_5, %c0_6] : memref<32x256xf32, #tpu.memory_space<vmem>>, vector<32x256xf32>
    tpu.vector_store %arg4[%c0_5, %c0_6], %6 {strides = array<i32>} : memref<32x256xf32, #tpu.memory_space<vmem>>, vector<32x256xf32>,
    return
  }
  func.func @transform_0(%arg0: i32) -> (i32, i32) {
    %c0_i32 = arith.constant 0 : i32
    %c0_i32_0 = arith.constant 0 : i32
    return %c0_i32, %arg0 : i32, i32
  }
  func.func @transform_1(%arg0: i32) -> (i32, i32) {
    %c0_i32 = arith.constant 0 : i32
    %c0_i32_0 = arith.constant 0 : i32
    %c0_i32_1 = arith.constant 0 : i32
    return %c0_i32, %c0_i32_0 : i32, i32
  }
  func.func @transform_2(%arg0: i32) -> (i32, i32) {
    %c0_i32 = arith.constant 0 : i32
    %c0_i32_0 = arith.constant 0 : i32
    %c0_i32_1 = arith.constant 0 : i32
    return %c0_i32, %c0_i32_0 : i32, i32
  }
  func.func @transform_3(%arg0: i32) -> (i32, i32) {
    %c0_i32 = arith.constant 0 : i32
    %c0_i32_0 = arith.constant 0 : i32
    return %c0_i32, %arg0 : i32, i32
  }
}

</mosaic_0001>

<llo_original>
// kernel: tpu_custom_call.1
$region0: #{tpu_custom_call.1}
  #allocation0 [shape = 'u32[]', space=smem, size = 0x4, offset = 0x4, fixed_abs, tag = 'smem constant byte address 0x4 - core index']
  #allocation1 [shape = 'u32[144,128]{1,0:T(1,128)}', space=vmem, size = 0x12000, scoped, tag = 'internal scratch']
  %s0 = inlined_call_operand.hbm [shape: f32[32,256], index: 0, kind: input, shape index: {}]
  %s1 = inlined_call_operand.vmem [shape: f32[32,32], index: 1, kind: input, shape index: {}]
  %s2 = inlined_call_operand.vmem [shape: f32[32,1], index: 2, kind: input, shape index: {}]
  %s3 = inlined_call_operand.hbm [shape: f32[32,256], index: 3, kind: output, shape index: {}]
  %s4 = sld [smem:[#allocation0]]
  $region26: #{tpu_custom_call.1} parent=0
    _
  %s6 = ssub.s32 1, %s4
  %s7 = scalar_select 0, %s6, %s4
  $region1: #{tpu_custom_call.1} parent=0
    #allocation2 [shape = 'u8[32768]{0}', space=vmem, size = 0x8000, scoped, tag = 'input window, operand 0, single buffered']
    #allocation3 [shape = 's32[1]{0}', space=sflag, size = 0x4, scoped, tag = 'scoped memory for tpu_custom_call.1']
    #allocation4 [shape = 's32[1]{0}', space=sflag, size = 0x4, scoped, tag = 'scoped memory for tpu_custom_call.1']
    #allocation5 [shape = 'u8[32768]{0}', space=vmem, size = 0x8000, scoped, tag = 'output window, operand 0, single buffered']
    %8 = vsyncpa [#allocation3], 0
    %9 = vsyncpa [#allocation4], 0
    // Predicated region
    $region2: #{tpu_custom_call.1} parent=1 // pred_check
      _
    $region3: #{tpu_custom_call.1} parent=1 // pred_check_branch
      %11 = sbr.rel (0) target = $region5
    $region4: #{tpu_custom_call.1} parent=1 // pred_region
      %s13 = ssub.s32 1024, 1024
      %14 = vsyncadd [#allocation3], %s13
      %s15 = sshll.u32 [#allocation2], 4
      %s16 = int_to_ptr.vmem [resolvable:$true] %s15
      %21 = dma.hbm_to_vmem [thread:$0]  %s0, 1024, %s16, [#allocation3], 256, 256, 16
    $region5: #{tpu_custom_call.1} parent=1 // pred_fallthru
      _
    // Predicated region
    $region6: #{tpu_custom_call.1} parent=1 // pred_check
      _
    $region7: #{tpu_custom_call.1} parent=1 // pred_check_branch
      %23 = sbr.rel (0) target = $region9
    $region8: #{tpu_custom_call.1} parent=1 // pred_region
      _
    $region9: #{tpu_custom_call.1} parent=1 // pred_fallthru
      _
    // Predicated region
    $region10: #{tpu_custom_call.1} parent=1 // pred_check
      _
    $region11: #{tpu_custom_call.1} parent=1 // pred_check_branch
      %25 = sbr.rel (0) target = $region13
    $region12: #{tpu_custom_call.1} parent=1 // pred_region
      _
    $region13: #{tpu_custom_call.1} parent=1 // pred_fallthru
      _
    // Predicated region
    $region14: #{tpu_custom_call.1} parent=1 // pred_check
      _
    $region15: #{tpu_custom_call.1} parent=1 // pred_check_branch
      %27 = sbr.rel (0) target = $region17
    $region16: #{tpu_custom_call.1} parent=1 // pred_region
      %28 = dma.done [#allocation3], 1024
    $region17: #{tpu_custom_call.1} parent=1 // pred_fallthru
      _
    %v29 = vld [vmem:[#allocation2] sm:$0xff]
    %v30 = vld [vmem:[#allocation2 + $0x8] sm:$0xff]
    %v31 = vld [vmem:[#allocation2 + $0x10] sm:$0xff]
    %v32 = vld [vmem:[#allocation2 + $0x18] sm:$0xff]
    %v33 = vld [vmem:[#allocation2 + $0x20] sm:$0xff]
    %v34 = vld [vmem:[#allocation2 + $0x28] sm:$0xff]
    %v35 = vld [vmem:[#allocation2 + $0x30] sm:$0xff]
    %v36 = vld [vmem:[#allocation2 + $0x38] sm:$0xff]
    %v37 = vld [vmem:[%s1] sm:$0xff]
    %v38 = vld [vmem:[%s1 + $0x8] sm:$0xff]
    %v39 = vld [vmem:[%s1 + $0x10] sm:$0xff]
    %v40 = vld [vmem:[%s1 + $0x18] sm:$0xff]
    %v41 = vld [vmem:[%s2] sm:$0xff]
    %v42 = vld [vmem:[%s2 + $0x8] sm:$0xff]
    %v43 = vld [vmem:[%s2 + $0x10] sm:$0xff]
    %v44 = vld [vmem:[%s2 + $0x18] sm:$0xff]
    %46 = vset.pattern.permute.xlu0 0
    %47 = vperm.xlu0 %46, %v41
    %v48 = vpop.permute.xlu0 %47
    %51 = vset.pattern.permute.xlu0 0
    %52 = vperm.xlu0 %51, %v42
    %v53 = vpop.permute.xlu0 %52
    %56 = vset.pattern.permute.xlu0 0
    %57 = vperm.xlu0 %56, %v43
    %v58 = vpop.permute.xlu0 %57
    %61 = vset.pattern.permute.xlu0 0
    %62 = vperm.xlu0 %61, %v44
    %v63 = vpop.permute.xlu0 %62
    %vm65 = vcmask 261120
    %v67 = vsel %vm65, %v37, 0
    %v70 = vsel %vm65, %v38, 0
    %v73 = vsel %vm65, %v39, 0
    %v76 = vsel %vm65, %v40, 0
    %78 = vmatprep.subr.mxu0 %v30
    %79 = vmatpush1.msra.mxu0 %v29
    %80 = vmatprep.subr.mxu0 %v32
    %81 = vmatpush1.msra.mxu0 %v31
    %82 = vmatprep.subr.mxu0 %v34
    %83 = vmatpush1.msra.mxu0 %v33
    %84 = vmatprep.subr.mxu0 %v36
    %85 = vmatpush1.msra.mxu0 %v35
    %86 = vmatprep.subr.mxu0 0.0
    %87 = vmatpush1.msra.mxu0 0.0
    %88 = vmatprep.subr.mxu0 0.0
    %89 = vmatpush1.msra.mxu0 0.0
    %90 = vmatprep.subr.mxu0 0.0
    %91 = vmatpush1.msra.mxu0 0.0
    %92 = vmatprep.subr.mxu0 0.0
    %93 = vmatpush1.msra.mxu0 0.0
    %94 = vmatprep.subr.mxu0 0.0
    %95 = vmatpush1.msra.mxu0 0.0
    %96 = vmatprep.subr.mxu0 0.0
    %97 = vmatpush1.msra.mxu0 0.0
    %98 = vmatprep.subr.mxu0 0.0
    %99 = vmatpush1.msra.mxu0 0.0
    %100 = vmatprep.subr.mxu0 0.0
    %101 = vmatpush1.msra.mxu0 0.0
    %102 = vmatprep.subr.mxu0 0.0
    %103 = vmatpush1.msra.mxu0 0.0
    %104 = vmatprep.subr.mxu0 0.0
    %105 = vmatpush1.msra.mxu0 0.0
    %106 = vmatprep.subr.mxu0 0.0
    %107 = vmatpush1.msra.mxu0 0.0
    %108 = vmatprep.subr.mxu0 0.0
    %109 = vmatpush1.msra.mxu0 0.0
    %110 = vmatprep.subr.mxu0 0.0
    %111 = vmatpush1.msra.mxu0 0.0
    %112 = vmatprep.subr.mxu0 0.0
    %113 = vmatpush1.msra.mxu0 0.0
    %114 = vmatprep.subr.mxu0 0.0
    %115 = vmatpush1.msra.mxu0 0.0
    %116 = vmatprep.subr.mxu0 0.0
    %117 = vmatpush1.msra.mxu0 0.0
    %118 = vmatprep.subr.mxu0 0.0
    %119 = vmatpush1.msra.mxu0 0.0
    %120 = vmatprep.subr.mxu0 0.0
    %121 = vmatpush1.msra.mxu0 0.0
    %122 = vmatprep.subr.mxu0 0.0
    %123 = vmatpush1.msra.mxu0 0.0
    %124 = vmatprep.subr.mxu0 0.0
    %125 = vmatpush1.msra.mxu0 0.0
    %126 = vmatprep.subr.mxu0 0.0
    %127 = vmatpush1.msra.mxu0 0.0
    %128 = vmatprep.subr.mxu0 0.0
    %129 = vmatpush1.msra.mxu0 0.0
    %130 = vmatprep.subr.mxu0 0.0
    %131 = vmatpush1.msra.mxu0 0.0
    %132 = vmatprep.subr.mxu0 0.0
    %133 = vmatpush1.msra.mxu0 0.0
    %134 = vmatprep.subr.mxu0 0.0
    %135 = vmatpush1.msra.mxu0 0.0
    %136 = vmatprep.subr.mxu0 0.0
    %137 = vmatpush1.msra.mxu0 0.0
    %138 = vmatprep.subr.mxu0 0.0
    %139 = vmatpush1.msra.mxu0 0.0
    %140 = vmatprep.subr.mxu0 0.0
    %141 = vmatpush1.msra.mxu0 0.0
    %142 = vmatprep.mubr.f32.mxu0 0.0
    %143 = vmatmul.mubr.f32.gmra.mrb[0].mxu0 %v67
    %v144 = vpop.f32.mrb[0].mxu0
    %v145 = vadd.f32 %v48, %v144
    %v146 = vpop.f32.mrb[0].mxu0
    %v147 = vadd.f32 %v48, %v146
    %148 = vmatprep.mubr.f32.mxu0 0.0
    %149 = vmatmul.mubr.f32.gmra.mrb[0].mxu0 %v70
    %v150 = vpop.f32.mrb[0].mxu0
    %v151 = vadd.f32 %v53, %v150
    %v152 = vpop.f32.mrb[0].mxu0
    %v153 = vadd.f32 %v53, %v152
    %154 = vmatprep.mubr.f32.mxu0 0.0
    %155 = vmatmul.mubr.f32.gmra.mrb[0].mxu0 %v73
    %v156 = vpop.f32.mrb[0].mxu0
    %v157 = vadd.f32 %v58, %v156
    %v158 = vpop.f32.mrb[0].mxu0
    %v159 = vadd.f32 %v58, %v158
    %160 = vmatprep.mubr.f32.mxu0 0.0
    %161 = vmatmul.mubr.f32.gmra.mrb[0].mxu0 %v76
    %v162 = vpop.f32.mrb[0].mxu0
    %v163 = vadd.f32 %v63, %v162
    %v164 = vpop.f32.mrb[0].mxu0
    %v165 = vadd.f32 %v63, %v164
    %166 = vdwg.mxu0
    %v167 = vadd.f32 %v145, %v29
    %v168 = vadd.f32 %v147, %v30
    %v169 = vadd.f32 %v151, %v31
    %v170 = vadd.f32 %v153, %v32
    %v171 = vadd.f32 %v157, %v33
    %v172 = vadd.f32 %v159, %v34
    %v173 = vadd.f32 %v163, %v35
    %v174 = vadd.f32 %v165, %v36
    %175 = vst [vmem:[#allocation5] sm:$0xff] %v167
    %176 = vst [vmem:[#allocation5 + $0x8] sm:$0xff] %v168
    %177 = vst [vmem:[#allocation5 + $0x10] sm:$0xff] %v169
    %178 = vst [vmem:[#allocation5 + $0x18] sm:$0xff] %v170
    %179 = vst [vmem:[#allocation5 + $0x20] sm:$0xff] %v171
    %180 = vst [vmem:[#allocation5 + $0x28] sm:$0xff] %v172
    %181 = vst [vmem:[#allocation5 + $0x30] sm:$0xff] %v173
    %182 = vst [vmem:[#allocation5 + $0x38] sm:$0xff] %v174
    // Predicated region
    $region18: #{tpu_custom_call.1} parent=1 // pred_check
      _
    $region19: #{tpu_custom_call.1} parent=1 // pred_check_branch
      %184 = sbr.rel (0) target = $region21
    $region20: #{tpu_custom_call.1} parent=1 // pred_region
      %s186 = ssub.s32 1024, 1024
      %187 = vsyncadd [#allocation4], %s186
      %s188 = sshll.u32 [#allocation5], 4
      %s189 = int_to_ptr.vmem [resolvable:$true] %s188
      %194 = dma.vmem_to_hbm [thread:$0]  %s189, 1024, %s3, [#allocation4], 256, 256, 16
    $region21: #{tpu_custom_call.1} parent=1 // pred_fallthru
      _
    // Predicated region
    $region22: #{tpu_custom_call.1} parent=1 // pred_check
      _
    $region23: #{tpu_custom_call.1} parent=1 // pred_check_branch
      %196 = sbr.rel (0) target = $region25
    $region24: #{tpu_custom_call.1} parent=1 // pred_region
      %197 = dma.done [#allocation4], 1024
    $region25: #{tpu_custom_call.1} parent=1 // pred_fallthru
      _
    %198 = vsyncpa [#allocation3], 1
    %199 = vsyncpa [#allocation4], 1

</llo_original>
